<compile_context>
chip_gen: v5e
topology: v5e:2x2
jax: 0.10.0
libtpu: 0.0.40
codegen_flags: <defaults>
</compile_context>

<pallas_src>
import functools
import math

import jax
import jax.numpy as jnp
from jax.experimental import pallas as pl
from jax.experimental.pallas import tpu as pltpu


# ---------------------------------------------------------------------------
# Hardware / tiling helpers
# ---------------------------------------------------------------------------

def _vmem_capacity_bytes():
    """Physical VMEM capacity; falls back to 128 MiB (v5e/v6e) if unknown."""
    try:
        info = pltpu.get_tpu_info()
        cap = getattr(info, "vmem_capacity_bytes", None)
        if cap:
            return int(cap)
    except Exception:
        pass
    return 128 << 20


def _tile_targets():
    """Per-generation tile targets (tm, tn, tk)."""
    vmem = _vmem_capacity_bytes()
    if vmem <= (64 << 20):
        # v7x: 64 MiB VMEM.  512 tiles double-buffered are only ~7-12 MiB
        # f32, well under budget -> 4x fewer grid steps than 256 tiles and
        # half the HBM re-reads in the K-split path.
        return 512, 512, 512
    # v5e / v6e: 128 MiB VMEM.  Wider tn halves X re-reads for K-split
    # matmuls; double-buffered footprint stays ~20-25 MiB.
    return 512, 1024, 512


def _round_up(x, m):
    return ((x + m - 1) // m) * m


def _tile_and_pad(dim, target, granule):
    """Return (tile, padded_dim).

    dim <= target -> full-extent block (always layout-legal), no padding.
    Otherwise pad `dim` to a multiple of `granule` and use the largest
    multiple of `granule` <= target that divides the padded dim.  This
    replaces the old full-dim fallback that could exceed VMEM for awkward
    (prime-ish) dims.
    """
    if dim <= target:
        return dim, dim
    padded = _round_up(dim, granule)
    t = (target // granule) * granule
    while t >= granule:
        if padded % t == 0:
            return t, padded
        t -= granule
    return granule, padded  # unreachable: granule always divides padded


def _pad2(a, rows, cols):
    r, c = a.shape
    if r == rows and c == cols:
        return a
    return jnp.pad(a, ((0, rows - r), (0, cols - c)))


# ---------------------------------------------------------------------------
# Kernels
# ---------------------------------------------------------------------------

_SEED_MIX = 1640531527  # large odd constant: decorrelate per-tile PRNG streams


def _epilogue(y_f32, b_ref, seed_ref, tile_id, *, use_relu, dropout_r, training):
    y = y_f32 + b_ref[...].astype(jnp.float32)
    if use_relu:
        y = jnp.maximum(y, 0.0)
    if dropout_r > 0.0 and training:
        # Inverted dropout (nn.Dropout training semantics) with the TPU
        # hardware PRNG: integer threshold compare on raw bits.  p -> 1.0
        # under-drops negligibly due to the 2^32-1 clamp.
        # TODO(synk): not bit-identical to torch.nn.Dropout's RNG stream and
        # the mask depends on tile geometry (statistically equivalent only).
        pltpu.prng_seed(seed_ref[0] + tile_id * _SEED_MIX)
        bits = pltpu.bitcast(pltpu.prng_random_bits(y.shape), jnp.uint32)
        threshold = jnp.uint32(min(int(dropout_r * 4294967296.0), 4294967295))
        keep = bits >= threshold
        y = jnp.where(keep, y * jnp.float32(1.0 / (1.0 - dropout_r)), 0.0)
    return y


def _fc_kernel_fullk(seed_ref, x_ref, w_ref, b_ref, o_ref, *,
                     use_relu, dropout_r, training):
    """K fits in one tile: no accumulator scratch, no reduction axis.
    Grid is (N // tn, M // tm) with the N axis outermost so the (K, tn)
    weight stripe stays resident across the whole M sweep."""
    y = jnp.dot(x_ref[...], w_ref[...], preferred_element_type=jnp.float32)
    tile_id = pl.program_id(0) * pl.num_programs(1) + pl.program_id(1)
    y = _epilogue(y, b_ref, seed_ref, tile_id,
                  use_relu=use_relu, dropout_r=dropout_r, training=training)
    o_ref[...] = y.astype(o_ref.dtype)


def _fc_kernel_ksplit(seed_ref, x_ref, w_ref, b_ref, o_ref, acc_ref, *,
                      use_relu, dropout_r, training):
    """K split across the innermost grid axis: f32 accumulator scratch."""
    k = pl.program_id(2)

    @pl.when(k == 0)
    def _():
        acc_ref[...] = jnp.zeros_like(acc_ref)

    acc_ref[...] += jnp.dot(x_ref[...], w_ref[...],
                            preferred_element_type=jnp.float32)

    @pl.when(k == pl.num_programs(2) - 1)
    def _():
        tile_id = pl.program_id(0) * pl.num_programs(1) + pl.program_id(1)
        y = _epilogue(acc_ref[...], b_ref, seed_ref, tile_id,
                      use_relu=use_relu, dropout_r=dropout_r, training=training)
        o_ref[...] = y.astype(o_ref.dtype)


def _mlp_fused_kernel(seed_ref, x_ref, w1_ref, b1_ref, w2_ref, b2_ref, o_ref, *,
                      use_relu, dropout_r, training, h_dtype):
    """Both Linears fused: h = epi(x @ w1 + b1) stays in VMEM/vregs and is
    immediately consumed by the second matmul; it is never written to HBM."""
    h = jnp.dot(x_ref[...], w1_ref[...], preferred_element_type=jnp.float32)
    h = _epilogue(h, b1_ref, seed_ref, pl.program_id(0),
                  use_relu=use_relu, dropout_r=dropout_r, training=training)
    y = jnp.dot(h.astype(h_dtype), w2_ref[...],
                preferred_element_type=jnp.float32)
    y = y + b2_ref[...].astype(jnp.float32)
    o_ref[...] = y.astype(o_ref.dtype)


# ---------------------------------------------------------------------------
# Wrappers
# ---------------------------------------------------------------------------

def fc_forward(x, w_t, b, *, use_relu=True, dropout_r=0.0, training=False,
               seed=0, mxu_dtype=None, out_dtype=None):
    """Fused Linear (+ReLU +Dropout).  x: (..., K); w_t: (K, N); b: (N,)."""
    orig_shape = x.shape
    K = orig_shape[-1]
    N = w_t.shape[1]
    M = 1
    for d in orig_shape[:-1]:
        M *= d
    out_dtype = x.dtype if out_dtype is None else out_dtype

    x2 = x.reshape(M, K)
    b2 = b.reshape(1, N)

    # Cast MXU inputs in the wrapper (NOT per-step inside the kernel): halves
    # X/W DMA bytes and removes a per-grid-step VPU cast of the whole tile.
    if mxu_dtype is not None and x2.dtype != jnp.dtype(mxu_dtype):
        x2 = x2.astype(mxu_dtype)
    if mxu_dtype is not None and w_t.dtype != jnp.dtype(mxu_dtype):
        w_t = w_t.astype(mxu_dtype)

    tm_t, tn_t, tk_t = _tile_targets()
    tm, Mp = _tile_and_pad(M, tm_t, 16)    # 16: bf16 sublane packing friendly
    tn, Np = _tile_and_pad(N, tn_t, 256)   # keep MXU's 256-lane width busy
    tk, Kp = _tile_and_pad(K, tk_t, 256)

    x2 = _pad2(x2, Mp, Kp)
    w_t = _pad2(w_t, Kp, Np)
    b2 = _pad2(b2, 1, Np)

    k_split = (Kp // tk) > 1

    # VMEM budget from the ACTUAL DMA'd dtypes (post-cast), double-buffered,
    # plus the f32 accumulator when K is split.
    in_it = x2.dtype.itemsize
    w_it = w_t.dtype.itemsize
    out_it = jnp.dtype(out_dtype).itemsize
    est = 2 * (tm * tk * in_it + tk * tn * w_it + tn * w_it) + 2 * tm * tn * out_it
    if k_split:
        est += tm * tn * 4
    vmem_cap = _vmem_capacity_bytes()
    vmem_limit = int(min(max(32 << 20, 2 * est), int(vmem_cap * 0.9)))

    seed_arr = jnp.asarray([seed], dtype=jnp.int32)

    if not k_split:
        kernel = functools.partial(_fc_kernel_fullk, use_relu=use_relu,
                                   dropout_r=dropout_r, training=training)
        grid_spec = pltpu.PrefetchScalarGridSpec(
            num_scalar_prefetch=1,
            grid=(Np // tn, Mp // tm),
            in_specs=[
                pl.BlockSpec((tm, Kp), lambda j, i, s: (i, 0)),
                pl.BlockSpec((Kp, tn), lambda j, i, s: (0, j)),
                pl.BlockSpec((1, tn), lambda j, i, s: (0, j)),
            ],
            out_specs=pl.BlockSpec((tm, tn), lambda j, i, s: (i, j)),
        )
        dim_sem = ("parallel", "parallel")
    else:
        kernel = functools.partial(_fc_kernel_ksplit, use_relu=use_relu,
                                   dropout_r=dropout_r, training=training)
        grid_spec = pltpu.PrefetchScalarGridSpec(
            num_scalar_prefetch=1,
            grid=(Mp // tm, Np // tn, Kp // tk),
            in_specs=[
                pl.BlockSpec((tm, tk), lambda i, j, k, s: (i, k)),
                pl.BlockSpec((tk, tn), lambda i, j, k, s: (k, j)),
                pl.BlockSpec((1, tn), lambda i, j, k, s: (0, j)),
            ],
            out_specs=pl.BlockSpec((tm, tn), lambda i, j, k, s: (i, j)),
            scratch_shapes=[pltpu.VMEM((tm, tn), jnp.float32)],
        )
        dim_sem = ("parallel", "parallel", "arbitrary")

    out = pl.pallas_call(
        kernel,
        out_shape=jax.ShapeDtypeStruct((Mp, Np), out_dtype),
        grid_spec=grid_spec,
        compiler_params=pltpu.CompilerParams(
            dimension_semantics=dim_sem,
            vmem_limit_bytes=vmem_limit),
    )(seed_arr, x2, w_t, b2)

    out = out[:M, :N]
    return out.reshape(orig_shape[:-1] + (N,))


def mlp_forward(x, w1_t, b1, w2_t, b2, *, dropout_r=0.0, use_relu=True,
                training=False, seed=0, mxu_dtype=jnp.bfloat16, fuse=None):
    """MLP.forward: linear(fc(x)).  fc = Linear -> ReLU? -> Dropout?.

    mxu_dtype=bf16 (default) feeds the MXU bf16 inputs with f32 accumulation;
    pass mxu_dtype=None for exact f32 matmul semantics.  fuse=None auto-picks
    the single-kernel fused path when weights + a hidden tile fit in VMEM.
    """
    orig_shape = x.shape
    K = orig_shape[-1]
    MID = w1_t.shape[1]
    OUT = w2_t.shape[1]
    M = 1
    for d in orig_shape[:-1]:
        M *= d
    out_dtype = x.dtype
    compute_dtype = jnp.dtype(mxu_dtype) if mxu_dtype is not None else x.dtype

    tm_t, _, _ = _tile_targets()
    tm, Mp = _tile_and_pad(M, tm_t, 16)

    vmem_cap = _vmem_capacity_bytes()
    in_it = compute_dtype.itemsize if mxu_dtype is not None else x.dtype.itemsize
    w_it = compute_dtype.itemsize if mxu_dtype is not None else w1_t.dtype.itemsize
    est_fused = (2 * tm * K * in_it
                 + 2 * (K * MID + MID) * w_it
                 + 2 * (MID * OUT + OUT) * w_it
                 + 2 * tm * OUT * jnp.dtype(out_dtype).itemsize
                 + 2 * tm * MID * 4)
    can_fuse = est_fused <= int(vmem_cap * 0.45)
    if fuse is None:
        fuse = can_fuse
    fuse = bool(fuse) and can_fuse  # hard VMEM gate even if caller forces

    if fuse:
        x2 = x.reshape(M, K)
        b1r = b1.reshape(1, MID)
        b2r = b2.reshape(1, OUT)
        if mxu_dtype is not None:
            x2 = x2.astype(compute_dtype)
            w1c = w1_t.astype(compute_dtype)
            w2c = w2_t.astype(compute_dtype)
        else:
            w1c, w2c = w1_t, w2_t
        x2 = _pad2(x2, Mp, K)
        seed_arr = jnp.asarray([seed], dtype=jnp.int32)
        kernel = functools.partial(
            _mlp_fused_kernel, use_relu=use_relu, dropout_r=dropout_r,
            training=training, h_dtype=compute_dtype)
        vmem_limit = int(min(max(32 << 20, int(1.5 * est_fused)),
                             int(vmem_cap * 0.9)))
        grid_spec = pltpu.PrefetchScalarGridSpec(
            num_scalar_prefetch=1,
            grid=(Mp // tm,),
            in_specs=[
                pl.BlockSpec((tm, K), lambda i, s: (i, 0)),
                pl.BlockSpec((K, MID), lambda i, s: (0, 0)),
                pl.BlockSpec((1, MID), lambda i, s: (0, 0)),
                pl.BlockSpec((MID, OUT), lambda i, s: (0, 0)),
                pl.BlockSpec((1, OUT), lambda i, s: (0, 0)),
            ],
            out_specs=pl.BlockSpec((tm, OUT), lambda i, s: (i, 0)),
        )
        out = pl.pallas_call(
            kernel,
            out_shape=jax.ShapeDtypeStruct((Mp, OUT), out_dtype),
            grid_spec=grid_spec,
            compiler_params=pltpu.CompilerParams(
                dimension_semantics=("parallel",),
                vmem_limit_bytes=vmem_limit),
        )(seed_arr, x2, w1c, b1r, w2c, b2r)
        return out[:M].reshape(orig_shape[:-1] + (OUT,))

    # Unfused: two pallas_calls.  With bf16 MXU inputs the intermediate h is
    # emitted in bf16 so layer 2 consumes it directly (half HBM traffic).
    h = fc_forward(x, w1_t, b1, use_relu=use_relu, dropout_r=dropout_r,
                   training=training, seed=seed, mxu_dtype=mxu_dtype,
                   out_dtype=compute_dtype)
    return fc_forward(h, w2_t, b2, use_relu=False, dropout_r=0.0,
                      training=False, seed=seed + 1, mxu_dtype=mxu_dtype,
                      out_dtype=out_dtype)


def init_linear_params(key, in_size, out_size, dtype=jnp.float32):
    """Deterministic init matching nn.Linear's uniform(+-1/sqrt(fan_in)) bounds.
    torch stores weight as (out, in); we keep its transpose (in, out)."""
    kw, kb = jax.random.split(key)
    bound = 1.0 / math.sqrt(in_size)
    w_t = jax.random.uniform(kw, (in_size, out_size), dtype,
                             minval=-bound, maxval=bound)
    b = jax.random.uniform(kb, (out_size,), dtype,
                           minval=-bound, maxval=bound)
    return w_t, b


if __name__ == "__main__":
    # MLP(in_size=32, mid_size=128, out_size=64, dropout_r=0.0, use_relu=True)
    B, S, IN, MID, OUT = 2, 8, 32, 128, 64
    key = jax.random.PRNGKey(0)
    kx, k1, k2 = jax.random.split(key, 3)

    x = jax.random.normal(kx, (B, S, IN), dtype=jnp.float32)
    w1_t, b1 = init_linear_params(k1, IN, MID)
    w2_t, b2 = init_linear_params(k2, MID, OUT)

    # Plain-JAX reference (f32).
    h_ref = jnp.maximum(jnp.einsum("bsk,kn->bsn", x, w1_t) + b1, 0.0)
    ref = jnp.einsum("bsk,kn->bsn", h_ref, w2_t) + b2

    # 1) Fused single-kernel path, f32 MXU inputs (exact module semantics).
    y = mlp_forward(x, w1_t, b1, w2_t, b2, dropout_r=0.0, use_relu=True,
                    training=False, mxu_dtype=None)
    y = jax.block_until_ready(y)
    assert y.shape == (B, S, OUT)
    assert jnp.allclose(y, ref, atol=1e-4, rtol=1e-4)

    # 2) Fused path with default bf16 MXU inputs (f32 accumulation).
    y_bf = jax.block_until_ready(
        mlp_forward(x, w1_t, b1, w2_t, b2, dropout_r=0.0, use_relu=True,
                    training=False))
    assert jnp.allclose(y_bf, ref, atol=5e-2, rtol=5e-2)

    # 3) Unfused two-kernel path (exercises fc_forward full-K grid ordering).
    y_uf = jax.block_until_ready(
        mlp_forward(x, w1_t, b1, w2_t, b2, dropout_r=0.0, use_relu=True,
                    training=False, mxu_dtype=None, fuse=False))
    assert jnp.allclose(y_uf, ref, atol=1e-4, rtol=1e-4)

    # 4) K-split smoke test: K > tk target forces the reduction grid axis and
    #    exercises host-side K padding (1100 -> 1280, tk=256, 5 k-steps).
    M2, K2, N2 = 24, 1100, 384
    ka, kb = jax.random.split(key)
    xa = jax.random.normal(ka, (M2, K2), dtype=jnp.float32)
    wa, ba = init_linear_params(kb, K2, N2)
    ya = jax.block_until_ready(
        fc_forward(xa, wa, ba, use_relu=True, dropout_r=0.0, training=False))
    ref_a = jnp.maximum(xa @ wa + ba, 0.0)
    assert jnp.allclose(ya, ref_a, atol=2e-3, rtol=2e-3)

    print("KERNEL_OK")
</pallas_src>

<mosaic_0001>
module attributes {stable_mosaic.version = 11 : i64} {
  func.func @_mlp_fused_kernel(%arg0: i32, %arg1: memref<1xi32, #tpu.memory_space<smem>>, %arg2: memref<16x32xf32, #tpu.memory_space<vmem>>, %arg3: memref<32x128xf32, #tpu.memory_space<vmem>>, %arg4: memref<1x128xf32, #tpu.memory_space<vmem>>, %arg5: memref<128x64xf32, #tpu.memory_space<vmem>>, %arg6: memref<1x64xf32, #tpu.memory_space<vmem>>, %arg7: memref<16x64xf32, #tpu.memory_space<vmem>>) attributes {dimension_semantics = [#tpu.dimension_semantics<parallel>], iteration_bounds = array<i64: 1>, scalar_prefetch = 1 : i64, scratch_operands = 0 : i64, tpu.core_type = #tpu.core_type<tc>, window_params = [{transform_indices = @transform_0, window_bounds = array<i64: 16, 32>}, {pipeline_mode = #tpu.pipeline_mode<synchronous>, transform_indices = @transform_1, window_bounds = array<i64: 32, 128>}, {pipeline_mode = #tpu.pipeline_mode<synchronous>, transform_indices = @transform_2, window_bounds = array<i64: 1, 128>}, {pipeline_mode = #tpu.pipeline_mode<synchronous>, transform_indices = @transform_3, window_bounds = array<i64: 128, 64>}, {pipeline_mode = #tpu.pipeline_mode<synchronous>, transform_indices = @transform_4, window_bounds = array<i64: 1, 64>}, {transform_indices = @transform_5, window_bounds = array<i64: 16, 64>}]} {
    %c0 = arith.constant 0 : index
    %c0_0 = arith.constant 0 : index
    %0 = vector.load %arg2[%c0, %c0_0] : memref<16x32xf32, #tpu.memory_space<vmem>>, vector<16x32xf32>
    %c0_1 = arith.constant 0 : index
    %c0_2 = arith.constant 0 : index
    %1 = vector.load %arg3[%c0_1, %c0_2] : memref<32x128xf32, #tpu.memory_space<vmem>>, vector<32x128xf32>
    %cst = arith.constant dense<0.000000e+00> : vector<16x128xf32>
    %2 = tpu.matmul %0, %1, %cst {dimension_numbers = #tpu.dot_dimension_numbers<[1], [0], [0], [1], [0, 0, 1, 1], [], []>} : vector<16x32xf32>, vector<32x128xf32>, vector<16x128xf32> -> vector<16x128xf32>
    %c0_3 = arith.constant 0 : index
    %c0_4 = arith.constant 0 : index
    %3 = vector.load %arg4[%c0_3, %c0_4] : memref<1x128xf32, #tpu.memory_space<vmem>>, vector<1x128xf32>
    %4 = vector.broadcast %3 : vector<1x128xf32> to vector<16x128xf32>
    %5 = arith.addf %2, %4 : vector<16x128xf32>
    %cst_5 = arith.constant 0.000000e+00 : f32
    %6 = vector.broadcast %cst_5 : f32 to vector<16x128xf32>
    %7 = arith.maximumf %5, %6 : vector<16x128xf32>
    %c0_6 = arith.constant 0 : index
    %c0_7 = arith.constant 0 : index
    %8 = vector.load %arg5[%c0_6, %c0_7] : memref<128x64xf32, #tpu.memory_space<vmem>>, vector<128x64xf32>
    %cst_8 = arith.constant dense<0.000000e+00> : vector<16x64xf32>
    %9 = tpu.matmul %7, %8, %cst_8 {dimension_numbers = #tpu.dot_dimension_numbers<[1], [0], [0], [1], [0, 0, 1, 1], [], []>} : vector<16x128xf32>, vector<128x64xf32>, vector<16x64xf32> -> vector<16x64xf32>
    %c0_9 = arith.constant 0 : index
    %c0_10 = arith.constant 0 : index
    %10 = vector.load %arg6[%c0_9, %c0_10] : memref<1x64xf32, #tpu.memory_space<vmem>>, vector<1x64xf32>
    %11 = vector.broadcast %10 : vector<1x64xf32> to vector<16x64xf32>
    %12 = arith.addf %9, %11 : vector<16x64xf32>
    %c0_11 = arith.constant 0 : index
    %c0_12 = arith.constant 0 : index
    %13 = vector.load %arg7[%c0_11, %c0_12] : memref<16x64xf32, #tpu.memory_space<vmem>>, vector<16x64xf32>
    tpu.vector_store %arg7[%c0_11, %c0_12], %12 {strides = array<i32>} : memref<16x64xf32, #tpu.memory_space<vmem>>, vector<16x64xf32>,
    return
  }
  func.func @transform_0(%arg0: i32, %arg1: memref<1xi32, #tpu.memory_space<smem>>) -> (i32, i32) {
    %c0_i32 = arith.constant 0 : i32
    %c0_i32_0 = arith.constant 0 : i32
    return %arg0, %c0_i32 : i32, i32
  }
  func.func @transform_1(%arg0: i32, %arg1: memref<1xi32, #tpu.memory_space<smem>>) -> (i32, i32) {
    %c0_i32 = arith.constant 0 : i32
    %c0_i32_0 = arith.constant 0 : i32
    %c0_i32_1 = arith.constant 0 : i32
    return %c0_i32, %c0_i32_0 : i32, i32
  }
  func.func @transform_2(%arg0: i32, %arg1: memref<1xi32, #tpu.memory_space<smem>>) -> (i32, i32) {
    %c0_i32 = arith.constant 0 : i32
    %c0_i32_0 = arith.constant 0 : i32
    %c0_i32_1 = arith.constant 0 : i32
    return %c0_i32, %c0_i32_0 : i32, i32
  }
  func.func @transform_3(%arg0: i32, %arg1: memref<1xi32, #tpu.memory_space<smem>>) -> (i32, i32) {
    %c0_i32 = arith.constant 0 : i32
    %c0_i32_0 = arith.constant 0 : i32
    %c0_i32_1 = arith.constant 0 : i32
    return %c0_i32, %c0_i32_0 : i32, i32
  }
  func.func @transform_4(%arg0: i32, %arg1: memref<1xi32, #tpu.memory_space<smem>>) -> (i32, i32) {
    %c0_i32 = arith.constant 0 : i32
    %c0_i32_0 = arith.constant 0 : i32
    %c0_i32_1 = arith.constant 0 : i32
    return %c0_i32, %c0_i32_0 : i32, i32
  }
  func.func @transform_5(%arg0: i32, %arg1: memref<1xi32, #tpu.memory_space<smem>>) -> (i32, i32) {
    %c0_i32 = arith.constant 0 : i32
    %c0_i32_0 = arith.constant 0 : i32
    return %arg0, %c0_i32 : i32, i32
  }
}

</mosaic_0001>

<llo_original>
// kernel: tpu_custom_call.1
$region0: #{tpu_custom_call.1}
  #allocation0 [shape = 'u32[]', space=smem, size = 0x4, offset = 0x4, fixed_abs, tag = 'smem constant byte address 0x4 - core index']
  #allocation1 [shape = 'u32[72,128]{1,0:T(1,128)}', space=vmem, size = 0x9000, scoped, tag = 'internal scratch']
  #allocation2 [shape = 's32[1]{0}', space=sflag, size = 0x4, scoped, tag = 'scoped memory for tpu_custom_call.1']
  #allocation3 [shape = 's32[1]{0:T(128)S(6)}', space=smem, size = 0x200, scoped, tag = 'prefetched SMEM operand 0']
  %s0 = inlined_call_operand.<no memory space> [shape: s32[1], index: 0, kind: input, shape index: {}]
  %s1 = inlined_call_operand.vmem [shape: f32[16,32], index: 1, kind: input, shape index: {}]
  %s2 = inlined_call_operand.vmem [shape: f32[32,128], index: 2, kind: input, shape index: {}]
  %s3 = inlined_call_operand.vmem [shape: f32[1,128], index: 3, kind: input, shape index: {}]
  %s4 = inlined_call_operand.vmem [shape: f32[128,64], index: 4, kind: input, shape index: {}]
  %s5 = inlined_call_operand.vmem [shape: f32[1,64], index: 5, kind: input, shape index: {}]
  %s6 = inlined_call_operand.hbm [shape: f32[16,64], index: 6, kind: output, shape index: {}]
  %s7 = sld [smem:[#allocation0]]
  $region30: #{tpu_custom_call.1} parent=0
    _
  %s9 = ssub.s32 1, %s7
  %s10 = scalar_select 0, %s9, %s7
  %11 = sst [smem:[#allocation3]] %s0
  $region1: #{tpu_custom_call.1} parent=0
    #allocation4 [shape = 'u8[8192]{0}', space=vmem, size = 0x2000, scoped, tag = 'output window, operand 0, single buffered']
    #allocation5 [shape = 's32[1]{0}', space=sflag, size = 0x4, scoped, tag = 'scoped memory for tpu_custom_call.1']
    %12 = vsyncpa [#allocation5], 0
    // Predicated region
    $region2: #{tpu_custom_call.1} parent=1 // pred_check
      _
    $region3: #{tpu_custom_call.1} parent=1 // pred_check_branch
      %14 = sbr.rel (0) target = $region5
    $region4: #{tpu_custom_call.1} parent=1 // pred_region
      _
    $region5: #{tpu_custom_call.1} parent=1 // pred_fallthru
      _
    // Predicated region
    $region6: #{tpu_custom_call.1} parent=1 // pred_check
      _
    $region7: #{tpu_custom_call.1} parent=1 // pred_check_branch
      %16 = sbr.rel (0) target = $region9
    $region8: #{tpu_custom_call.1} parent=1 // pred_region
      _
    $region9: #{tpu_custom_call.1} parent=1 // pred_fallthru
      _
    // Predicated region
    $region10: #{tpu_custom_call.1} parent=1 // pred_check
      _
    $region11: #{tpu_custom_call.1} parent=1 // pred_check_branch
      %18 = sbr.rel (0) target = $region13
    $region12: #{tpu_custom_call.1} parent=1 // pred_region
      _
    $region13: #{tpu_custom_call.1} parent=1 // pred_fallthru
      _
    // Predicated region
    $region14: #{tpu_custom_call.1} parent=1 // pred_check
      _
    $region15: #{tpu_custom_call.1} parent=1 // pred_check_branch
      %20 = sbr.rel (0) target = $region17
    $region16: #{tpu_custom_call.1} parent=1 // pred_region
      _
    $region17: #{tpu_custom_call.1} parent=1 // pred_fallthru
      _
    // Predicated region
    $region18: #{tpu_custom_call.1} parent=1 // pred_check
      _
    $region19: #{tpu_custom_call.1} parent=1 // pred_check_branch
      %22 = sbr.rel (0) target = $region21
    $region20: #{tpu_custom_call.1} parent=1 // pred_region
      _
    $region21: #{tpu_custom_call.1} parent=1 // pred_fallthru
      _
    %v23 = vld [vmem:[%s1] sm:$0xff]
    %v24 = vld [vmem:[%s1 + $0x8] sm:$0xff]
    %v25 = vld [vmem:[%s2] sm:$0xff]
    %v26 = vld [vmem:[%s2 + $0x8] sm:$0xff]
    %v27 = vld [vmem:[%s2 + $0x10] sm:$0xff]
    %v28 = vld [vmem:[%s2 + $0x18] sm:$0xff]
    %v29 = vld [vmem:[%s3] sm:$0x1]
    %v31 = vperm.slane %v29, 0
    %vm33 = vcmask 261120
    %v35 = vsel %vm33, %v23, 0
    %v38 = vsel %vm33, %v24, 0
    %40 = vmatpush.msra.mxu0 0.0
    %41 = vmatpush.msra.mxu0 0.0
    %42 = vmatpush.msra.mxu0 0.0
    %43 = vmatpush.msra.mxu0 0.0
    %44 = vmatpush.msra.mxu0 0.0
    %45 = vmatpush.msra.mxu0 0.0
    %46 = vmatpush.msra.mxu0 0.0
    %47 = vmatpush.msra.mxu0 0.0
    %48 = vmatpush.msra.mxu0 0.0
    %49 = vmatpush.msra.mxu0 0.0
    %50 = vmatpush.msra.mxu0 0.0
    %51 = vmatpush.msra.mxu0 0.0
    %52 = vmatpush.msra.mxu0 %v28
    %53 = vmatpush.msra.mxu0 %v27
    %54 = vmatpush.msra.mxu0 %v26
    %55 = vmatpush.msra.mxu0 %v25
    %56 = vmatmul.f32.gmra.mxu0 %v35
    %v57 = vpop.f32.mrf.mxu0
    %v58 = vadd.f32 %v31, %v57
    %59 = vmatmul.f32.gmra.mxu0 %v38
    %v60 = vpop.f32.mrf.mxu0
    %v61 = vadd.f32 %v31, %v60
    %62 = vdwg.mxu0
    %v63 = vmax.f32 %v58, 0.0
    %v64 = vmax.f32 %v61, 0.0
    %v65 = vld [vmem:[%s4] sm:$0xff]
    %v66 = vld [vmem:[%s4 + $0x8] sm:$0xff]
    %v67 = vld [vmem:[%s4 + $0x10] sm:$0xff]
    %v68 = vld [vmem:[%s4 + $0x18] sm:$0xff]
    %v69 = vld [vmem:[%s4 + $0x20] sm:$0xff]
    %v70 = vld [vmem:[%s4 + $0x28] sm:$0xff]
    %v71 = vld [vmem:[%s4 + $0x30] sm:$0xff]
    %v72 = vld [vmem:[%s4 + $0x38] sm:$0xff]
    %v73 = vld [vmem:[%s4 + $0x40] sm:$0xff]
    %v74 = vld [vmem:[%s4 + $0x48] sm:$0xff]
    %v75 = vld [vmem:[%s4 + $0x50] sm:$0xff]
    %v76 = vld [vmem:[%s4 + $0x58] sm:$0xff]
    %v77 = vld [vmem:[%s4 + $0x60] sm:$0xff]
    %v78 = vld [vmem:[%s4 + $0x68] sm:$0xff]
    %v79 = vld [vmem:[%s4 + $0x70] sm:$0xff]
    %v80 = vld [vmem:[%s4 + $0x78] sm:$0xff]
    %v81 = vld [vmem:[%s5] sm:$0x1]
    %v83 = vperm.slane %v81, 0
    %85 = vmatpush.msra.mxu0 %v80
    %86 = vmatpush.msra.mxu0 %v79
    %87 = vmatpush.msra.mxu0 %v78
    %88 = vmatpush.msra.mxu0 %v77
    %89 = vmatpush.msra.mxu0 %v76
    %90 = vmatpush.msra.mxu0 %v75
    %91 = vmatpush.msra.mxu0 %v74
    %92 = vmatpush.msra.mxu0 %v73
    %93 = vmatpush.msra.mxu0 %v72
    %94 = vmatpush.msra.mxu0 %v71
    %95 = vmatpush.msra.mxu0 %v70
    %96 = vmatpush.msra.mxu0 %v69
    %97 = vmatpush.msra.mxu0 %v68
    %98 = vmatpush.msra.mxu0 %v67
    %99 = vmatpush.msra.mxu0 %v66
    %100 = vmatpush.msra.mxu0 %v65
    %101 = vmatmul.f32.gmra.mxu0 %v63
    %v102 = vpop.f32.mrf.mxu0
    %v103 = vadd.f32 %v83, %v102
    %104 = vmatmul.f32.gmra.mxu0 %v64
    %v105 = vpop.f32.mrf.mxu0
    %v106 = vadd.f32 %v83, %v105
    %107 = vdwg.mxu0
    %vm108 = vcmask 523264
    %109 = vst.msk [vmem:[#allocation4] sm:$0xff] %vm108, %v103
    %110 = vst.msk [vmem:[#allocation4 + $0x8] sm:$0xff] %vm108, %v106
    // Predicated region
    $region22: #{tpu_custom_call.1} parent=1 // pred_check
      _
    $region23: #{tpu_custom_call.1} parent=1 // pred_check_branch
      %112 = sbr.rel (0) target = $region25
    $region24: #{tpu_custom_call.1} parent=1 // pred_region
      %114 = vsyncadd [#allocation5], 0
      %s115 = sshll.u32 [#allocation4], 4
      %s116 = int_to_ptr.vmem [resolvable:$true] %s115
      %s117 = sshll.u32 %s6, 4
      %s118 = int_to_ptr.hbm [resolvable:$true] %s117
      %123 = dma.vmem_to_hbm [thread:$0]  %s116, 256, %s118, [#allocation5], 128, 128, 8
    $region25: #{tpu_custom_call.1} parent=1 // pred_fallthru
      _
    // Predicated region
    $region26: #{tpu_custom_call.1} parent=1 // pred_check
      _
    $region27: #{tpu_custom_call.1} parent=1 // pred_check_branch
      %125 = sbr.rel (0) target = $region29
    $region28: #{tpu_custom_call.1} parent=1 // pred_region
      %127 = dma.done [#allocation5], 256
    $region29: #{tpu_custom_call.1} parent=1 // pred_fallthru
      _
    %128 = vsyncpa [#allocation5], 1

</llo_original>
